<compile_context>
chip_gen: v7x
topology: tpu7x:2x2x1
jax: 0.10.0
libtpu: 0.0.40
codegen_flags: <defaults>
</compile_context>

<pallas_src>
import math
import functools

import jax
import jax.numpy as jnp
from jax.experimental import pallas as pl
from jax.experimental.pallas import tpu as pltpu


# ----------------------------------------------------------------------------- kernels
def _kv_proj_kernel(x_ref, wkv_ref, bkv_ref, k_ref, v_ref):
    # x_ref:   (1, ts, F) input tile
    # wkv_ref: (F, 2D) bf16 fused K|V weights; bkv_ref: (1, 2D) f32 fused bias
    # k_ref, v_ref: (1, ts, D) bf16 outputs
    D = k_ref.shape[-1]
    kv = jnp.dot(x_ref[0].astype(jnp.bfloat16), wkv_ref[...],
                 preferred_element_type=jnp.float32) + bkv_ref[0]        # (ts, 2D) f32
    k_ref[0] = kv[:, :D].astype(jnp.bfloat16)
    v_ref[0] = kv[:, D:].astype(jnp.bfloat16)


def _attn_kernel(x_ref, wq_ref, bq_ref, k_ref, v_ref, mask_ref, out_ref, *, n_heads):
    # x_ref:   (1, tq, F) query tile of x
    # wq_ref:  (F, D) bf16, pre-scaled by 1/sqrt(W);  bq_ref: (1, D) f32, pre-scaled
    # k_ref, v_ref: (1, S, D) bf16 full-sequence K / V planes for this batch
    # mask_ref: (1, 1, S) f32 (1.0 = attend, 0.0 = masked)
    # out_ref: (1, tq, D)
    D = out_ref.shape[-1]
    W = D // n_heads

    # Q projection for this tile (scale already folded into wq/bq).  bf16 MXU, f32 acc.
    q = jnp.dot(x_ref[0].astype(jnp.bfloat16), wq_ref[...],
                preferred_element_type=jnp.float32) + bq_ref[0]          # (tq, D) f32
    q = q.astype(jnp.bfloat16)

    k = k_ref[0]                                                         # (S, D) bf16
    v = v_ref[0]                                                         # (S, D) bf16

    # Additive mask penalty kept at (1, S); broadcast happens inside the subtract.
    neg_bias = 10000.0 * (1.0 - mask_ref[0])                             # (1, S) f32

    # Static loop over heads; per-head outputs assembled in registers and written
    # with a single lane-dense (tq, D) store (no masked partial stores).
    head_outs = []
    for h in range(n_heads):
        qh = q[:, h * W:(h + 1) * W]                                     # (tq, W) bf16
        kh = k[:, h * W:(h + 1) * W]                                     # (S, W) bf16
        vh = v[:, h * W:(h + 1) * W]                                     # (S, W) bf16

        # Contract the last axes of q and k directly: no explicit kh.T transpose.
        s = jax.lax.dot_general(qh, kh, (((1,), (1,)), ((), ())),
                                preferred_element_type=jnp.float32)      # (tq, S) f32
        s = s - neg_bias

        # Softmax over the key axis (f32 math, exact normalization).
        s_max = jnp.max(s, axis=-1, keepdims=True)
        p = jnp.exp(s - s_max)
        p = p / jnp.sum(p, axis=-1, keepdims=True)

        head_outs.append(jnp.dot(p.astype(jnp.bfloat16), vh,
                                 preferred_element_type=jnp.float32))    # (tq, W) f32

    out_ref[0] = jnp.concatenate(head_outs, axis=-1).astype(out_ref.dtype)


# ----------------------------------------------------------------------------- wrapper
def _vmem_limit_bytes():
    """~75% of physical VMEM: ~96 MiB on v5e/v6e, ~48 MiB on v7x; safe fallback 48 MiB."""
    try:
        cap = pltpu.get_tpu_info().vmem_capacity_bytes
    except Exception:  # conservative default if the query is unavailable
        cap = 64 * 1024 * 1024
    return min(int(cap * 3 // 4), 100 * 1024 * 1024)


def _pick_tile(S, block):
    """Largest multiple-of-8 divisor of S that is <= block (or S itself)."""
    if block is None or block >= S:
        return S
    best = None
    for t in range(8, block + 1, 8):
        if S % t == 0:
            best = t
    if best is not None:
        return best
    return S  # TODO(synk): pad/mask ragged sequences instead of whole-S fallback.


def multi_headed_self_attention(x, mask, params, n_heads, *, q_block=1024, kv_block=512):
    """x: (B, S, F); mask: (B, S) (1.0 = attend, 0.0 = masked). Returns (B, S, D)."""
    B, S, F = x.shape
    wq, bq = params["wq"], params["bq"]   # wq: (F, D), bq: (D,)
    wk, bk = params["wk"], params["bk"]
    wv, bv = params["wv"], params["bv"]
    D = wq.shape[1]
    assert D % n_heads == 0, "n_heads must divide dim"
    W = D // n_heads
    scale = 1.0 / math.sqrt(W)

    # Fold the 1/sqrt(W) score scale into the Q projection; cast weights to bf16.
    wq_s = (wq * scale).astype(jnp.bfloat16)                 # (F, D)
    bq_s = (bq * scale).reshape(1, D).astype(jnp.float32)    # (1, D)
    # Fused K|V weights: one MXU pass with N = 2D.
    wkv = jnp.concatenate([wk, wv], axis=1).astype(jnp.bfloat16)          # (F, 2D)
    bkv = jnp.concatenate([bk, bv]).reshape(1, 2 * D).astype(jnp.float32)  # (1, 2D)

    mask3 = mask.reshape(B, 1, S).astype(jnp.float32)

    vmem_limit = _vmem_limit_bytes()

    # ---- K/V projection kernel (streams x once, writes bf16 K / V planes) ----
    ts = _pick_tile(S, kv_block)
    k_arr, v_arr = pl.pallas_call(
        _kv_proj_kernel,
        out_shape=(jax.ShapeDtypeStruct((B, S, D), jnp.bfloat16),
                   jax.ShapeDtypeStruct((B, S, D), jnp.bfloat16)),
        grid_spec=pltpu.PrefetchScalarGridSpec(
            num_scalar_prefetch=0,
            grid=(B, S // ts),
            in_specs=[
                pl.BlockSpec((1, ts, F), lambda b, i: (b, i, 0)),     # x tile
                pl.BlockSpec((F, 2 * D), lambda b, i: (0, 0)),        # wkv
                pl.BlockSpec((1, 2 * D), lambda b, i: (0, 0)),        # bkv
            ],
            out_specs=(
                pl.BlockSpec((1, ts, D), lambda b, i: (b, i, 0)),     # K plane
                pl.BlockSpec((1, ts, D), lambda b, i: (b, i, 0)),     # V plane
            ),
        ),
        compiler_params=pltpu.CompilerParams(
            dimension_semantics=("parallel", "parallel"),
            vmem_limit_bytes=vmem_limit,
        ),
    )(x, wkv, bkv)

    # ---- attention kernel: per-(batch, query-tile), fully parallel grid ----
    tq = _pick_tile(S, q_block)
    kernel = functools.partial(_attn_kernel, n_heads=n_heads)
    out = pl.pallas_call(
        kernel,
        out_shape=jax.ShapeDtypeStruct((B, S, D), x.dtype),
        grid_spec=pltpu.PrefetchScalarGridSpec(
            num_scalar_prefetch=0,
            grid=(B, S // tq),
            in_specs=[
                pl.BlockSpec((1, tq, F), lambda b, qi: (b, qi, 0)),   # x query tile
                pl.BlockSpec((F, D), lambda b, qi: (0, 0)),           # wq (pre-scaled)
                pl.BlockSpec((1, D), lambda b, qi: (0, 0)),           # bq (pre-scaled)
                pl.BlockSpec((1, S, D), lambda b, qi: (b, 0, 0)),     # K plane (bf16)
                pl.BlockSpec((1, S, D), lambda b, qi: (b, 0, 0)),     # V plane (bf16)
                pl.BlockSpec((1, 1, S), lambda b, qi: (b, 0, 0)),     # mask
            ],
            out_specs=pl.BlockSpec((1, tq, D), lambda b, qi: (b, qi, 0)),
        ),
        compiler_params=pltpu.CompilerParams(
            # Both axes independent -> both v7x TensorCores used even at B == 1.
            dimension_semantics=("parallel", "parallel"),
            vmem_limit_bytes=vmem_limit,
        ),
    )(x, wq_s, bq_s, k_arr, v_arr, mask3)
    return out


# ----------------------------------------------------------------------------- reference
def _reference(x, mask, params, n_heads):
    """Pure-JAX f32 reference mirroring the PyTorch forward exactly."""
    B, S, F = x.shape
    q = x @ params["wq"] + params["bq"]
    k = x @ params["wk"] + params["bk"]
    v = x @ params["wv"] + params["bv"]
    D = q.shape[-1]
    W = D // n_heads

    def split_heads(t):   # (B, S, D) -> (B, H, S, W)
        return t.reshape(B, S, n_heads, W).transpose(0, 2, 1, 3)

    qh, kh, vh = split_heads(q), split_heads(k), split_heads(v)
    scores = jnp.einsum("bhqw,bhkw->bhqk", qh, kh) / jnp.sqrt(jnp.float32(W))
    m = mask[:, None, None, :].astype(jnp.float32)
    scores = scores - 10000.0 * (1.0 - m)
    attn = jax.nn.softmax(scores, axis=-1)
    h = jnp.einsum("bhqk,bhkw->bhqw", attn, vh)            # (B, H, S, W)
    h = h.transpose(0, 2, 1, 3).reshape(B, S, D)
    return h


if __name__ == "__main__":
    key = jax.random.PRNGKey(0)
    B, S, feat_dim, dim, n_heads = 2, 8, 32, 32, 4

    k0, k1, k2, k3, k4, k5, k6, _, _ = jax.random.split(key, 9)
    # Deterministic init (uniform like PyTorch Linear default, bound = 1/sqrt(fan_in)).
    bound = 1.0 / math.sqrt(feat_dim)
    params = {
        "wq": jax.random.uniform(k0, (feat_dim, dim), jnp.float32, -bound, bound),
        "wk": jax.random.uniform(k1, (feat_dim, dim), jnp.float32, -bound, bound),
        "wv": jax.random.uniform(k2, (feat_dim, dim), jnp.float32, -bound, bound),
        "bq": jax.random.uniform(k3, (dim,), jnp.float32, -bound, bound),
        "bk": jax.random.uniform(k4, (dim,), jnp.float32, -bound, bound),
        "bv": jax.random.uniform(k5, (dim,), jnp.float32, -bound, bound),
    }

    x = jax.random.normal(k6, (B, S, feat_dim), jnp.float32)
    # Mask: 1.0 = attend, 0.0 = masked. Mask out last two positions of batch 1.
    mask = jnp.ones((B, S), jnp.float32).at[1, -2:].set(0.0)

    out = multi_headed_self_attention(x, mask, params, n_heads)
    out = jax.block_until_ready(out)

    ref = _reference(x, mask, params, n_heads)
    assert out.shape == (B, S, dim)
    # Tolerance covers bf16 MXU operands / bf16 K-V storage (f32 accumulation, exact
    # softmax normalization); measured error is well inside this budget.
    assert jnp.allclose(out, ref, atol=2e-2, rtol=2e-2), "mismatch vs reference"

    print("KERNEL_OK")
</pallas_src>

<mosaic_0001>
module attributes {stable_mosaic.version = 11 : i64} {
  func.func @_kv_proj_kernel(%arg0: i32, %arg1: i32, %arg2: memref<1x8x32xf32, #tpu.memory_space<vmem>>, %arg3: memref<32x64xbf16, #tpu.memory_space<vmem>>, %arg4: memref<1x64xf32, #tpu.memory_space<vmem>>, %arg5: memref<1x8x32xbf16, #tpu.memory_space<vmem>>, %arg6: memref<1x8x32xbf16, #tpu.memory_space<vmem>>) attributes {dimension_semantics = [#tpu.dimension_semantics<parallel>, #tpu.dimension_semantics<parallel>], iteration_bounds = array<i64: 2, 1>, scalar_prefetch = 0 : i64, scratch_operands = 0 : i64, tpu.core_type = #tpu.core_type<tc>, window_params = [{transform_indices = @transform_0, window_bounds = array<i64: 1, 8, 32>}, {pipeline_mode = #tpu.pipeline_mode<synchronous>, transform_indices = @transform_1, window_bounds = array<i64: 32, 64>}, {pipeline_mode = #tpu.pipeline_mode<synchronous>, transform_indices = @transform_2, window_bounds = array<i64: 1, 64>}, {transform_indices = @transform_3, window_bounds = array<i64: 1, 8, 32>}, {transform_indices = @transform_4, window_bounds = array<i64: 1, 8, 32>}]} {
    %c0 = arith.constant 0 : index
    %c0_0 = arith.constant 0 : index
    %c0_1 = arith.constant 0 : index
    %0 = vector.load %arg2[%c0, %c0_0, %c0_1] : memref<1x8x32xf32, #tpu.memory_space<vmem>>, vector<1x8x32xf32>
    %1 = vector.shape_cast %0 : vector<1x8x32xf32> to vector<8x32xf32>
    %2 = arith.truncf %1 : vector<8x32xf32> to vector<8x32xbf16>
    %c0_2 = arith.constant 0 : index
    %c0_3 = arith.constant 0 : index
    %3 = vector.load %arg3[%c0_2, %c0_3] : memref<32x64xbf16, #tpu.memory_space<vmem>>, vector<32x64xbf16>
    %cst = arith.constant dense<0.000000e+00> : vector<8x64xf32>
    %4 = tpu.matmul %2, %3, %cst {dimension_numbers = #tpu.dot_dimension_numbers<[1], [0], [0], [1], [0, 0, 1, 1], [], []>} : vector<8x32xbf16>, vector<32x64xbf16>, vector<8x64xf32> -> vector<8x64xf32>
    %c0_4 = arith.constant 0 : index
    %c0_5 = arith.constant 0 : index
    %5 = vector.load %arg4[%c0_4, %c0_5] : memref<1x64xf32, #tpu.memory_space<vmem>>, vector<1x64xf32>
    %6 = vector.shape_cast %5 : vector<1x64xf32> to vector<64xf32>
    %7 = vector.shape_cast %6 : vector<64xf32> to vector<1x64xf32>
    %8 = vector.broadcast %7 : vector<1x64xf32> to vector<8x64xf32>
    %9 = arith.addf %4, %8 : vector<8x64xf32>
    %10 = vector.extract_strided_slice %9 {offsets = [0, 0], sizes = [8, 32], strides = [1, 1]} : vector<8x64xf32> to vector<8x32xf32>
    %11 = arith.truncf %10 : vector<8x32xf32> to vector<8x32xbf16>
    %c0_6 = arith.constant 0 : index
    %c0_7 = arith.constant 0 : index
    %c0_8 = arith.constant 0 : index
    %12 = vector.load %arg5[%c0_6, %c0_7, %c0_8] : memref<1x8x32xbf16, #tpu.memory_space<vmem>>, vector<1x8x32xbf16>
    %13 = vector.shape_cast %12 : vector<1x8x32xbf16> to vector<8x32xbf16>
    %14 = vector.shape_cast %11 : vector<8x32xbf16> to vector<1x8x32xbf16>
    tpu.vector_store %arg5[%c0_6, %c0_7, %c0_8], %14 {strides = array<i32>} : memref<1x8x32xbf16, #tpu.memory_space<vmem>>, vector<1x8x32xbf16>,
    %15 = vector.extract_strided_slice %9 {offsets = [0, 32], sizes = [8, 32], strides = [1, 1]} : vector<8x64xf32> to vector<8x32xf32>
    %16 = arith.truncf %15 : vector<8x32xf32> to vector<8x32xbf16>
    %c0_9 = arith.constant 0 : index
    %c0_10 = arith.constant 0 : index
    %c0_11 = arith.constant 0 : index
    %17 = vector.load %arg6[%c0_9, %c0_10, %c0_11] : memref<1x8x32xbf16, #tpu.memory_space<vmem>>, vector<1x8x32xbf16>
    %18 = vector.shape_cast %17 : vector<1x8x32xbf16> to vector<8x32xbf16>
    %19 = vector.shape_cast %16 : vector<8x32xbf16> to vector<1x8x32xbf16>
    tpu.vector_store %arg6[%c0_9, %c0_10, %c0_11], %19 {strides = array<i32>} : memref<1x8x32xbf16, #tpu.memory_space<vmem>>, vector<1x8x32xbf16>,
    return
  }
  func.func @transform_0(%arg0: i32, %arg1: i32) -> (i32, i32, i32) {
    %c0_i32 = arith.constant 0 : i32
    %c0_i32_0 = arith.constant 0 : i32
    return %arg0, %arg1, %c0_i32 : i32, i32, i32
  }
  func.func @transform_1(%arg0: i32, %arg1: i32) -> (i32, i32) {
    %c0_i32 = arith.constant 0 : i32
    %c0_i32_0 = arith.constant 0 : i32
    %c0_i32_1 = arith.constant 0 : i32
    return %c0_i32, %c0_i32_0 : i32, i32
  }
  func.func @transform_2(%arg0: i32, %arg1: i32) -> (i32, i32) {
    %c0_i32 = arith.constant 0 : i32
    %c0_i32_0 = arith.constant 0 : i32
    %c0_i32_1 = arith.constant 0 : i32
    return %c0_i32, %c0_i32_0 : i32, i32
  }
  func.func @transform_3(%arg0: i32, %arg1: i32) -> (i32, i32, i32) {
    %c0_i32 = arith.constant 0 : i32
    %c0_i32_0 = arith.constant 0 : i32
    return %arg0, %arg1, %c0_i32 : i32, i32, i32
  }
  func.func @transform_4(%arg0: i32, %arg1: i32) -> (i32, i32, i32) {
    %c0_i32 = arith.constant 0 : i32
    %c0_i32_0 = arith.constant 0 : i32
    return %arg0, %arg1, %c0_i32 : i32, i32, i32
  }
}

</mosaic_0001>

<llo_original>
// kernel: tpu_custom_call.1
$region0: #{tpu_custom_call.1}
  #allocation0 [shape = 'u32[]', space=smem, size = 0x4, offset = 0x4, fixed_abs, tag = 'smem constant byte address 0x4 - core index']
  #allocation1 [shape = 'u32[144,128]{1,0:T(1,128)}', space=vmem, size = 0x12000, scoped, tag = 'internal scratch']
  %s0 = inlined_call_operand.hbm [shape: f32[2,8,32], index: 0, kind: input, shape index: {}]
  %s1 = inlined_call_operand.hbm [shape: bf16[32,64], index: 1, kind: input, shape index: {}]
  %s2 = inlined_call_operand.vmem [shape: f32[1,64], index: 2, kind: input, shape index: {}]
  %s3 = inlined_call_operand.hbm [shape: bf16[2,8,32], index: 3, kind: output, shape index: {0}]
  %s4 = inlined_call_operand.hbm [shape: bf16[2,8,32], index: 4, kind: output, shape index: {1}]
  %5 = xla_tuple %s3, %s4
  %s6 = sld [smem:[#allocation0]]
  $region61: #{tpu_custom_call.1} parent=0
    _
  %s8 = ssub.s32 1, %s6
  %s9 = scalar_select 0, %s8, %s6
  $region1: #{tpu_custom_call.1} parent=0
    #allocation2 [shape = 'u8[8192]{0}', space=vmem, size = 0x2000, scoped, tag = 'input window, operand 0']
    #allocation3 [shape = 's32[2]{0}', space=sflag, size = 0x8, scoped, tag = 'scoped memory for tpu_custom_call.1']
    #allocation4 [shape = 's32[2]{0}', space=sflag, size = 0x8, scoped, tag = 'scoped memory for tpu_custom_call.1']
    #allocation5 [shape = 'u8[8192]{0}', space=vmem, size = 0x2000, scoped, tag = 'input window, operand 1, single buffered']
    #allocation6 [shape = 's32[1]{0}', space=sflag, size = 0x4, scoped, tag = 'scoped memory for tpu_custom_call.1']
    #allocation7 [shape = 'u8[4096]{0}', space=vmem, size = 0x1000, scoped, tag = 'output window, operand 0']
    #allocation8 [shape = 'u8[4096]{0}', space=vmem, size = 0x1000, scoped, tag = 'output window, operand 1']
    #allocation9 [shape = 's32[2]{0}', space=sflag, size = 0x8, scoped, tag = 'scoped memory for tpu_custom_call.1']
    %10 = vsyncpa [#allocation3], 0
    %s11 = scalar_lea.sflag [#allocation3], 1
    %12 = vsyncpa %s11, 0
    %13 = vsyncpa [#allocation6], 0
    %14 = vsyncpa [#allocation4], 0
    %s15 = scalar_lea.sflag [#allocation4], 1
    %16 = vsyncpa %s15, 0
    %17 = vsyncpa [#allocation9], 0
    %s18 = scalar_lea.sflag [#allocation9], 1
    %19 = vsyncpa %s18, 0
    loop: start=0, step=1, limit=4
    $region2: #{tpu_custom_call.1} parent=1 // loop_pre_header
      _
    $region3: #{tpu_custom_call.1} parent=1 // loop_header
      %s21 = sphi 0, %s25
      %p22 = scmp.ge.s32.totalorder %s21, 4
      %s28 = sphi 0, %s40
      %s29 = sphi 0, %s36
      %s30 = sphi 0, %s28
      %s31 = sphi 0, %s29
      %s32 = sphi 0, %s30
      %s33 = sphi 0, %s31
      %s45 = sphi 0, %s47
      %s48 = sphi 0, %s45
      %s49 = sphi 0, %s48
      %s65 = sphi 0, %s49
      %s69 = sphi 0, %s69
      %s71 = sphi 0, %s69
      %s72 = sphi 0, %s71
      %s86 = sphi 0, %s72
      %s90 = sphi 0, %s90
      %s92 = sphi 0, %s90
      %s93 = sphi 0, %s92
      %s107 = sphi 0, %s93
      %s115 = sphi 0, %s117
      %s118 = sphi 0, %s115
      %s119 = sphi 0, %s118
      %s135 = sphi 0, %s119
      %s143 = sphi 0, %s145
      %s146 = sphi 0, %s143
      %s147 = sphi 0, %s146
      %s163 = sphi 0, %s147
    $region4: #{tpu_custom_call.1} parent=1 // loop_header_branch
      %24 = sbr.rel (%p22) target = $region8
    $region5: #{tpu_custom_call.1} parent=1 // loop_body
      %s26 = ssub.s32 %s21, 1
      %s27 = ssub.s32 %s21, 2
      %s34 = sadd.s32 1, %s29
      %p35 = scmp.ge.s32.totalorder %s34, 1
      %s36 = scalar_select %p35, 0, %s34
      %s37 = sadd.s32 1, %s28
      %s38 = scalar_select %p35, %s37, %s28
      %p39 = scmp.ge.s32.totalorder %s38, 2
      %s40 = scalar_select %p39, 0, %s38
      %s41 = ssub.s32 %s28, %s40
      %s42 = ssub.s32 %s29, %s36
      %s43 = sor.u32 %s41, %s42
      %p44 = scmp.eq.s32.totalorder %s43, 0
      %s46 = sadd.s32 %s45, 1
      %s47 = scalar_select %p44, %s45, %s46
      %p50 = pneg %p44
      %p51 = scmp.eq.s32.totalorder %s21, 1
      %p52 = por %p50, %p51
      %p53 = scmp.ne.s32.totalorder %s45, %s48
      %p54 = scmp.eq.s32.totalorder %s21, 0
      %p55 = por %p53, %p54
      %p56 = scmp.ne.s32.totalorder %s45, %s48
      %p57 = scmp.eq.s32.totalorder %s26, 1
      %p58 = por %p56, %p57
      %p59 = scmp.ne.s32.totalorder %s48, %s49
      %p60 = scmp.eq.s32.totalorder %s26, 0
      %p61 = por %p59, %p60
      %p62 = scmp.ne.s32.totalorder %s48, %s49
      %p63 = scmp.eq.s32.totalorder %s27, 1
      %p64 = por %p62, %p63
      %p66 = scmp.ne.s32.totalorder %s49, %s65
      %p67 = scmp.eq.s32.totalorder %s27, 0
      %p68 = por %p66, %p67
      %s70 = sadd.s32 %s69, 1
      %p73 = scmp.eq.s32.totalorder %s21, 1
      %p74 = scmp.ne.s32.totalorder %s69, %s71
      %p75 = scmp.eq.s32.totalorder %s21, 0
      %p76 = por %p74, %p75
      %p77 = scmp.ne.s32.totalorder %s69, %s71
      %p78 = scmp.eq.s32.totalorder %s26, 1
      %p79 = por %p77, %p78
      %p80 = scmp.ne.s32.totalorder %s71, %s72
      %p81 = scmp.eq.s32.totalorder %s26, 0
      %p82 = por %p80, %p81
      %p83 = scmp.ne.s32.totalorder %s71, %s72
      %p84 = scmp.eq.s32.totalorder %s27, 1
      %p85 = por %p83, %p84
      %p87 = scmp.ne.s32.totalorder %s72, %s86
      %p88 = scmp.eq.s32.totalorder %s27, 0
      %p89 = por %p87, %p88
      %s91 = sadd.s32 %s90, 1
      %p94 = scmp.eq.s32.totalorder %s21, 1
      %p95 = scmp.ne.s32.totalorder %s90, %s92
      %p96 = scmp.eq.s32.totalorder %s21, 0
      %p97 = por %p95, %p96
      %p98 = scmp.ne.s32.totalorder %s90, %s92
      %p99 = scmp.eq.s32.totalorder %s26, 1
      %p100 = por %p98, %p99
      %p101 = scmp.ne.s32.totalorder %s92, %s93
      %p102 = scmp.eq.s32.totalorder %s26, 0
      %p103 = por %p101, %p102
      %p104 = scmp.ne.s32.totalorder %s92, %s93
      %p105 = scmp.eq.s32.totalorder %s27, 1
      %p106 = por %p104, %p105
      %p108 = scmp.ne.s32.totalorder %s93, %s107
      %p109 = scmp.eq.s32.totalorder %s27, 0
      %p110 = por %p108, %p109
      %s111 = ssub.s32 %s28, %s40
      %s112 = ssub.s32 %s29, %s36
      %s113 = sor.u32 %s111, %s112
      %p114 = scmp.eq.s32.totalorder %s113, 0
      %s116 = sadd.s32 %s115, 1
      %s117 = scalar_select %p114, %s115, %s116
      %p120 = pneg %p114
      %p121 = scmp.eq.s32.totalorder %s21, 1
      %p122 = por %p120, %p121
      %p123 = scmp.ne.s32.totalorder %s115, %s118
      %p124 = scmp.eq.s32.totalorder %s21, 0
      %p125 = por %p123, %p124
      %p126 = scmp.ne.s32.totalorder %s115, %s118
      %p127 = scmp.eq.s32.totalorder %s26, 1
      %p128 = por %p126, %p127
      %p129 = scmp.ne.s32.totalorder %s118, %s119
      %p130 = scmp.eq.s32.totalorder %s26, 0
      %p131 = por %p129, %p130
      %p132 = scmp.ne.s32.totalorder %s118, %s119
      %p133 = scmp.eq.s32.totalorder %s27, 1
      %p134 = por %p132, %p133
      %p136 = scmp.ne.s32.totalorder %s119, %s135
      %p137 = scmp.eq.s32.totalorder %s27, 0
      %p138 = por %p136, %p137
      %s139 = ssub.s32 %s28, %s40
      %s140 = ssub.s32 %s29, %s36
      %s141 = sor.u32 %s139, %s140
      %p142 = scmp.eq.s32.totalorder %s141, 0
      %s144 = sadd.s32 %s143, 1
      %s145 = scalar_select %p142, %s143, %s144
      %p148 = pneg %p142
      %p149 = scmp.eq.s32.totalorder %s21, 1
      %p150 = por %p148, %p149
      %p151 = scmp.ne.s32.totalorder %s143, %s146
      %p152 = scmp.eq.s32.totalorder %s21, 0
      %p153 = por %p151, %p152
      %p154 = scmp.ne.s32.totalorder %s143, %s146
      %p155 = scmp.eq.s32.totalorder %s26, 1
      %p156 = por %p154, %p155
      %p157 = scmp.ne.s32.totalorder %s146, %s147
      %p158 = scmp.eq.s32.totalorder %s26, 0
      %p159 = por %p157, %p158
      %p160 = scmp.ne.s32.totalorder %s146, %s147
      %p161 = scmp.eq.s32.totalorder %s27, 1
      %p162 = por %p160, %p161
      %p164 = scmp.ne.s32.totalorder %s147, %s163
      %p165 = scmp.eq.s32.totalorder %s27, 0
      %p166 = por %p164, %p165
      %p167 = scmp.le.s32.totalorder 1, %s21
      %p168 = scmp.lt.s32.totalorder %s21, 3
      %p169 = pnand %p167, %p168
      %p170 = pneg %p169
      // Predicated region
      $region9: #{tpu_custom_call.1} parent=5 // pred_check
        _
      $region10: #{tpu_custom_call.1} parent=5 // pred_check_branch
        %172 = sbr.rel (%p169) target = $region12
      $region11: #{tpu_custom_call.1} parent=5 // pred_region
        %s173 = ssub.s32 %s21, 1
        // Predicated region
        $region13: #{tpu_custom_call.1} parent=11 // pred_check
          %p174 = pneg %p82
        $region14: #{tpu_custom_call.1} parent=11 // pred_check_branch
          %176 = sbr.rel (%p174) target = $region16
        $region15: #{tpu_custom_call.1} parent=11 // pred_region
          %s178 = ssub.s32 256, 256
          %179 = vsyncadd [#allocation6], %s178
          %s180 = sshll.u32 [#allocation5], 4
          %s181 = int_to_ptr.vmem [resolvable:$true] %s180
          %186 = dma.hbm_to_vmem [thread:$0]  %s1, 256, %s181, [#allocation6], 64, 64, 4
        $region16: #{tpu_custom_call.1} parent=11 // pred_fallthru
          _
        // Predicated region
        $region17: #{tpu_custom_call.1} parent=11 // pred_check
          %p187 = pneg %p103
        $region18: #{tpu_custom_call.1} parent=11 // pred_check_branch
          %189 = sbr.rel (%p187) target = $region20
        $region19: #{tpu_custom_call.1} parent=11 // pred_region
          _
        $region20: #{tpu_custom_call.1} parent=11 // pred_fallthru
          _
      $region12: #{tpu_custom_call.1} parent=5 // pred_fallthru
        _
      %p190 = scmp.lt.s32.totalorder %s21, 2
      // Predicated region
      $region21: #{tpu_custom_call.1} parent=5 // pred_check
        %p191 = pneg %p190
      $region22: #{tpu_custom_call.1} parent=5 // pred_check_branch
        %193 = sbr.rel (%p191) target = $region24
      $region23: #{tpu_custom_call.1} parent=5 // pred_region
        // Predicated region
        $region25: #{tpu_custom_call.1} parent=23 // pred_check
          %p194 = pneg %p55
        $region26: #{tpu_custom_call.1} parent=23 // pred_check_branch
          %196 = sbr.rel (%p194) target = $region28
        $region27: #{tpu_custom_call.1} parent=23 // pred_region
          %s197 = sand.u32 %s45, 1
          %s198 = scalar_lea.sflag [#allocation3], %s197
          %s199 = sand.u32 %s45, 1
          %s200 = smul.addr %s199, 8
          %s201 = scalar_lea.vmem [#allocation2], %s200
          %s203 = ssub.s32 128, 128
          %204 = vsyncadd %s198, %s203
          %s205 = sadd.s32 %s29, %s28
          %s206 = smul.addr %s205, 128
          %s207 = scalar_lea.hbm %s0, %s206
          %s209 = sshll.u32 %s201, 4
          %s210 = int_to_ptr.vmem [resolvable:$true] %s209
          %212 = dma.hbm_to_vmem [thread:$0]  %s207, 128, %s210, %s198
        $region28: #{tpu_custom_call.1} parent=23 // pred_fallthru
          _
      $region24: #{tpu_custom_call.1} parent=5 // pred_fallthru
        _
      %p213 = scmp.le.s32.totalorder 1, %s21
      %p214 = scmp.lt.s32.totalorder %s21, 3
      %p215 = pnand %p213, %p214
      %p216 = pneg %p215
      // Predicated region
      $region29: #{tpu_custom_call.1} parent=5 // pred_check
        _
      $region30: #{tpu_custom_call.1} parent=5 // pred_check_branch
        %218 = sbr.rel (%p215) target = $region32
      $region31: #{tpu_custom_call.1} parent=5 // pred_region
        %s219 = ssub.s32 %s21, 1
        %s220 = sand.u32 %s48, 1
        %s221 = scalar_lea.sflag [#allocation3], %s220
        %s222 = sand.u32 %s48, 1
        %s223 = smul.addr %s222, 8
        %s224 = scalar_lea.vmem [#allocation2], %s223
        // Predicated region
        $region33: #{tpu_custom_call.1} parent=31 // pred_check
          %p225 = pneg %p61
        $region34: #{tpu_custom_call.1} parent=31 // pred_check_branch
          %227 = sbr.rel (%p225) target = $region36
        $region35: #{tpu_custom_call.1} parent=31 // pred_region
          %228 = dma.done %s221, 128
        $region36: #{tpu_custom_call.1} parent=31 // pred_fallthru
          _
        // Predicated region
        $region37: #{tpu_custom_call.1} parent=31 // pred_check
          %p229 = pneg %p82
        $region38: #{tpu_custom_call.1} parent=31 // pred_check_branch
          %231 = sbr.rel (%p229) target = $region40
        $region39: #{tpu_custom_call.1} parent=31 // pred_region
          %232 = dma.done [#allocation6], 256
        $region40: #{tpu_custom_call.1} parent=31 // pred_fallthru
          _
        %s233 = sand.u32 %s48, 1
        %s234 = scalar_lea.sflag [#allocation3], %s233
        %s235 = sand.u32 %s48, 1
        %s236 = smul.addr %s235, 8
        %s237 = scalar_lea.vmem [#allocation2], %s236
        %p238 = pneg %p61
        %p239 = pneg %p58
        %p240 = pneg %p82
        %p241 = pneg %p79
        %p242 = pneg %p103
        %p243 = pneg %p100
        %p244 = pneg %p131
        %p245 = pneg %p128
        %s246 = sand.u32 %s118, 1
        %s247 = scalar_lea.sflag [#allocation4], %s246
        %s248 = sand.u32 %s118, 1
        %s249 = smul.addr %s248, 4
        %s250 = scalar_lea.vmem [#allocation7], %s249
        %p251 = pneg %p159
        %p252 = pneg %p156
        %s253 = sand.u32 %s146, 1
        %s254 = scalar_lea.sflag [#allocation9], %s253
        %s255 = sand.u32 %s146, 1
        %s256 = smul.addr %s255, 4
        %s257 = scalar_lea.vmem [#allocation8], %s256
        %v259 = vld [vmem:[%s224] sm:$0xff]
        %v260 = vpack.c.bf16 %v259, %v259
        %v261 = vld [vmem:[#allocation5] sm:$0xf]
        %v262 = vld [vmem:[#allocation5 + $0x4] sm:$0xf]
        %v263 = vld [vmem:[#allocation5 + $0x8] sm:$0xf]
        %v264 = vld [vmem:[#allocation5 + $0xc] sm:$0xf]
        %v265 = vld [vmem:[%s2] sm:$0x1]
        %v267 = vlaneseq
        %v268 = vshrl.u32 %v267, 7
        %v269 = vsub.s32 0, %v268
        %v270 = vrot.slane %v265, %v269
        %v276 = vunpack.c.l.b16 %v261
        %v277 = vunpack.c.l.b16 %v262
        %v278 = vunpack.c.l.b16 %v263
        %v279 = vunpack.c.l.b16 %v264
        %v280 = vpack.c.b16 %v277, %v276
        %v281 = vpack.c.b16 %v279, %v278
        %vm284 = vcmask 261120
        %v286 = vsel %vm284, %v260, 0
        %288 = vmatprep.subr.bf16.mxu0 0
        %289 = vmatpush1.bf16.msra.mxu0 %v280
        %290 = vmatprep.subr.bf16.mxu0 0
        %291 = vmatpush1.bf16.msra.mxu0 %v281
        %292 = vmatprep.subr.bf16.mxu0 0
        %293 = vmatpush1.bf16.msra.mxu0 0
        %294 = vmatprep.subr.bf16.mxu0 0
        %295 = vmatpush1.bf16.msra.mxu0 0
        %296 = vmatprep.subr.bf16.mxu0 0
        %297 = vmatpush1.bf16.msra.mxu0 0
        %298 = vmatprep.subr.bf16.mxu0 0
        %299 = vmatpush1.bf16.msra.mxu0 0
        %300 = vmatprep.subr.bf16.mxu0 0
        %301 = vmatpush1.bf16.msra.mxu0 0
        %302 = vmatprep.subr.bf16.mxu0 0
        %303 = vmatpush1.bf16.msra.mxu0 0
        %304 = vmatprep.subr.bf16.mxu0 0
        %305 = vmatpush1.bf16.msra.mxu0 0
        %306 = vmatprep.subr.bf16.mxu0 0
        %307 = vmatpush1.bf16.msra.mxu0 0
        %308 = vmatprep.subr.bf16.mxu0 0
        %309 = vmatpush1.bf16.msra.mxu0 0
        %310 = vmatprep.subr.bf16.mxu0 0
        %311 = vmatpush1.bf16.msra.mxu0 0
        %312 = vmatprep.subr.bf16.mxu0 0
        %313 = vmatpush1.bf16.msra.mxu0 0
        %314 = vmatprep.subr.bf16.mxu0 0
        %315 = vmatpush1.bf16.msra.mxu0 0
        %316 = vmatprep.subr.bf16.mxu0 0
        %317 = vmatpush1.bf16.msra.mxu0 0
        %318 = vmatprep.subr.bf16.mxu0 0
        %319 = vmatpush1.bf16.msra.mxu0 0
        %320 = vmatprep.mubr.bf16.mxu0 0
        %321 = vmatmul.mubr.bf16.gmra.mrb[0].mxu0 %v286
        %v322 = vpop.f32.mrb[0].mxu0
        %v323 = vadd.f32 %v270, %v322
        %v324 = vpop.f32.mrb[0].mxu0
        %v325 = vpop.f32.mrb[0].mxu0
        %v326 = vpop.f32.mrb[0].mxu0
        %327 = vdwg.mxu0
        %v328 = vpack.c.bf16 %v323, %v323
        %vm329 = vcmask 257024
        %330 = vst.msk [vmem:[%s250] sm:$0xf] %vm329, %v328
        %v332 = vunpack.c.l.b16 %v328
        %v333 = vpack.c.b16 %v332, %v332
        %334 = vrot.lane.b32.xlu0 %v333, 96
        %v335 = vpop.permute.xlu0 %334
        %337 = vst.msk [vmem:[%s257] sm:$0xf] %vm329, %v335
        %s338 = sand.u32 %s118, 1
        %s339 = scalar_lea.sflag [#allocation4], %s338
        %s340 = sand.u32 %s118, 1
        %s341 = smul.addr %s340, 4
        %s342 = scalar_lea.vmem [#allocation7], %s341
        %s343 = sand.u32 %s146, 1
        %s344 = scalar_lea.sflag [#allocation9], %s343
        %s345 = sand.u32 %s146, 1
        %s346 = smul.addr %s345, 4
        %s347 = scalar_lea.vmem [#allocation8], %s346
        // Predicated region
        $region41: #{tpu_custom_call.1} parent=31 // pred_check
          %p348 = pneg %p128
        $region42: #{tpu_custom_call.1} parent=31 // pred_check_branch
          %350 = sbr.rel (%p348) target = $region44
        $region43: #{tpu_custom_call.1} parent=31 // pred_region
          %s352 = ssub.s32 64, 64
          %353 = vsyncadd %s339, %s352
          %s354 = sadd.s32 %s31, %s30
          %s355 = smul.addr %s354, 64
          %s356 = scalar_lea.hbm %s3, %s355
          %s358 = sshll.u32 %s342, 4
          %s359 = int_to_ptr.vmem [resolvable:$true] %s358
          %361 = dma.vmem_to_hbm [thread:$0]  %s359, 64, %s356, %s339
        $region44: #{tpu_custom_call.1} parent=31 // pred_fallthru
          _
        // Predicated region
        $region45: #{tpu_custom_call.1} parent=31 // pred_check
          %p362 = pneg %p156
        $region46: #{tpu_custom_call.1} parent=31 // pred_check_branch
          %364 = sbr.rel (%p362) target = $region48
        $region47: #{tpu_custom_call.1} parent=31 // pred_region
          %s366 = ssub.s32 64, 64
          %367 = vsyncadd %s344, %s366
          %s368 = sadd.s32 %s31, %s30
          %s369 = smul.addr %s368, 64
          %s370 = scalar_lea.hbm %s4, %s369
          %s372 = sshll.u32 %s347, 4
          %s373 = int_to_ptr.vmem [resolvable:$true] %s372
          %375 = dma.vmem_to_hbm [thread:$0]  %s373, 64, %s370, %s344
        $region48: #{tpu_custom_call.1} parent=31 // pred_fallthru
          _
      $region32: #{tpu_custom_call.1} parent=5 // pred_fallthru
        _
      %p376 = scmp.le.s32.totalorder 2, %s21
      // Predicated region
      $region49: #{tpu_custom_call.1} parent=5 // pred_check
        %p377 = pneg %p376
      $region50: #{tpu_custom_call.1} parent=5 // pred_check_branch
        %379 = sbr.rel (%p377) target = $region52
      $region51: #{tpu_custom_call.1} parent=5 // pred_region
        %s380 = ssub.s32 %s21, 2
        // Predicated region
        $region53: #{tpu_custom_call.1} parent=51 // pred_check
          %p381 = pneg %p134
        $region54: #{tpu_custom_call.1} parent=51 // pred_check_branch
          %383 = sbr.rel (%p381) target = $region56
        $region55: #{tpu_custom_call.1} parent=51 // pred_region
          %s384 = sand.u32 %s119, 1
          %s385 = scalar_lea.sflag [#allocation4], %s384
          %s386 = sand.u32 %s119, 1
          %s387 = smul.addr %s386, 4
          %s388 = scalar_lea.vmem [#allocation7], %s387
          %389 = dma.done %s385, 64
        $region56: #{tpu_custom_call.1} parent=51 // pred_fallthru
          _
        // Predicated region
        $region57: #{tpu_custom_call.1} parent=51 // pred_check
          %p390 = pneg %p162
        $region58: #{tpu_custom_call.1} parent=51 // pred_check_branch
          %392 = sbr.rel (%p390) target = $region60
        $region59: #{tpu_custom_call.1} parent=51 // pred_region
          %s393 = sand.u32 %s147, 1
          %s394 = scalar_lea.sflag [#allocation9], %s393
          %s395 = sand.u32 %s147, 1
          %s396 = smul.addr %s395, 4
          %s397 = scalar_lea.vmem [#allocation8], %s396
          %398 = dma.done %s394, 64
        $region60: #{tpu_custom_call.1} parent=51 // pred_fallthru
          _
      $region52: #{tpu_custom_call.1} parent=5 // pred_fallthru
        _
    $region6: #{tpu_custom_call.1} parent=1 // loop_footer
      %s25 = sadd.s32 1, %s21
    $region7: #{tpu_custom_call.1} parent=1 // loop_footer_branch
      %20 = sbr.rel target = $region3
    $region8: #{tpu_custom_call.1} parent=1 // loop_exit
      _
    %399 = vsyncpa [#allocation3], 1
    %s400 = scalar_lea.sflag [#allocation3], 1
    %401 = vsyncpa %s400, 1
    %402 = vsyncpa [#allocation6], 1
    %403 = vsyncpa [#allocation4], 1
    %s404 = scalar_lea.sflag [#allocation4], 1
    %405 = vsyncpa %s404, 1
    %406 = vsyncpa [#allocation9], 1
    %s407 = scalar_lea.sflag [#allocation9], 1
    %408 = vsyncpa %s407, 1

</llo_original>
